<compile_context>
chip_gen: v6e
topology: v6e:2x2x1
jax: 0.10.0
libtpu: 0.0.40
codegen_flags: <defaults>
</compile_context>

<pallas_src>
import functools
import numpy as np
import jax
import jax.numpy as jnp
from jax.experimental import pallas as pl
from jax.experimental.pallas import tpu as pltpu


def _round_up(x, m):
    return ((x + m - 1) // m) * m


# ---------------------------------------------------------------------------
# One-time per-graph reachability kernel:  R = saturate((I + A^T)^num_hop)
# ---------------------------------------------------------------------------
def _reach_kernel(num_hop, adj_t_ref, r_ref):
    n = adj_t_ref.shape[0]
    row = jax.lax.broadcasted_iota(jnp.int32, (n, n), 0)
    col = jax.lax.broadcasted_iota(jnp.int32, (n, n), 1)
    r = (row == col).astype(jnp.float32)                  # identity: 0-hop reach
    for _ in range(num_hop):                              # unrolled (small num_hop)
        prop = jnp.dot(r.astype(jnp.bfloat16), adj_t_ref[...],
                       preferred_element_type=jnp.float32)
        r = jnp.minimum(r + prop, 1.0)                    # saturating OR
    r_ref[...] = r.astype(r_ref.dtype)


def build_graph_tables(edge_index, *, total_num_nodes, num_hop):
    """Build (once per graph; cache & reuse across batches) the dense bf16 tables:
         R     (Np, Np) : reachability within <= num_hop reversed hops
         ep_oh (Np, Ep) : src_onehot + tgt_onehot (per-edge endpoint counts)
    """
    E = edge_index.shape[1]
    N = total_num_nodes
    Np = _round_up(max(N, 128), 128)     # lane-aligned node axis
    Ep = _round_up(max(E, 128), 128)     # lane-aligned edge axis

    src = edge_index[0].astype(jnp.int32)
    tgt = edge_index[1].astype(jnp.int32)
    e_ids = jnp.arange(E, dtype=jnp.int32)

    # A^T[tgt, src] = 1 : propagation target -> source (flow='source_to_target')
    adj_t = (jnp.zeros((Np, Np), jnp.float32)
             .at[tgt, src].set(1.0)).astype(jnp.bfloat16)
    # fused endpoint matrix: column e holds +1 at src[e] and +1 at tgt[e]
    ep_oh = (jnp.zeros((Np, Ep), jnp.float32)
             .at[src, e_ids].add(1.0)
             .at[tgt, e_ids].add(1.0)).astype(jnp.bfloat16)

    # TODO(synk): for graphs where Np^2 bf16 no longer fits VMEM (v7x: 64 MiB),
    #             tile this kernel over a reduction axis / stream adj_t strips.
    reach = pl.pallas_call(
        functools.partial(_reach_kernel, num_hop),
        out_shape=jax.ShapeDtypeStruct((Np, Np), jnp.bfloat16),
        grid_spec=pltpu.PrefetchScalarGridSpec(
            num_scalar_prefetch=0,
            grid=(1,),
            in_specs=[pl.BlockSpec((Np, Np), lambda i: (0, 0))],
            out_specs=pl.BlockSpec((Np, Np), lambda i: (0, 0)),
        ),
        compiler_params=pltpu.CompilerParams(
            dimension_semantics=("arbitrary",)),
    )(adj_t)
    return reach, ep_oh


# ---------------------------------------------------------------------------
# Batched subgraph-mask kernel (one grid step = tb center nodes)
# ---------------------------------------------------------------------------
def _subgraph_kernel(ids_ref, r_ref, ep_ref, node_mask_ref, edge_mask_ref,
                     node_pos_ref):
    tb, n = node_mask_ref.shape
    ids = ids_ref[...]                                        # (tb, 1) int32
    iota = jax.lax.broadcasted_iota(jnp.int32, (tb, n), 1)    # node ids per lane
    onehot = (iota == ids).astype(jnp.bfloat16)               # center one-hots

    # reached[b, :] = R[ids[b], :]   (single MXU matmul; exact 0/1 result)
    reached = jnp.dot(onehot, r_ref[...], preferred_element_type=jnp.float32)
    node_mask_ref[...] = reached

    # per-edge endpoint count in {0, 1, 2}; count == 2 <=> both endpoints reached
    # (self-loop edges contribute 2 at one node, also correct).
    cnt = jnp.dot(reached.astype(jnp.bfloat16), ep_ref[...],
                  preferred_element_type=jnp.float32)
    edge_mask_ref[...] = (cnt >= 1.5).astype(jnp.float32)

    # node_position (inv): rank of center in sorted subset
    # = number of reached nodes with id < center id.
    lt = (iota < ids).astype(jnp.float32)
    node_pos_ref[...] = jnp.sum(reached * lt, axis=1,
                                keepdims=True).astype(jnp.int32)


def subgraph_extractor_pallas(node_list, edge_value, reach, ep_oh, *,
                              total_num_nodes, num_edges, tb=128):
    """Dense, batched version of subgraph_extractor.forward's hot path."""
    B = node_list.shape[0]
    N = total_num_nodes
    E = num_edges
    Np = reach.shape[0]
    Ep = ep_oh.shape[1]
    Bp = _round_up(B, tb)                 # keep B a multiple of the batch tile

    ids = jnp.zeros((Bp, 1), jnp.int32).at[:B, 0].set(node_list.astype(jnp.int32))

    out_shapes = (
        jax.ShapeDtypeStruct((Bp, Np), jnp.float32),   # node subset mask
        jax.ShapeDtypeStruct((Bp, Ep), jnp.float32),   # edge mask (tmp4)
        jax.ShapeDtypeStruct((Bp, 1), jnp.int32),      # node position (inv / y)
    )

    node_mask, edge_mask, node_pos = pl.pallas_call(
        _subgraph_kernel,
        out_shape=out_shapes,
        grid_spec=pltpu.PrefetchScalarGridSpec(
            num_scalar_prefetch=0,
            grid=(Bp // tb,),
            in_specs=[
                pl.BlockSpec((tb, 1), lambda i: (i, 0)),    # center node ids
                # grid-invariant operands (constant index_map -> no re-DMA).
                # TODO(synk): on v7x with large graphs, single-buffer these
                #             (pl.Buffered(1)) or stream E over a grid axis.
                pl.BlockSpec((Np, Np), lambda i: (0, 0)),   # reachability R
                pl.BlockSpec((Np, Ep), lambda i: (0, 0)),   # endpoint counts
            ],
            out_specs=[
                pl.BlockSpec((tb, Np), lambda i: (i, 0)),
                pl.BlockSpec((tb, Ep), lambda i: (i, 0)),
                pl.BlockSpec((tb, 1), lambda i: (i, 0)),
            ],
        ),
        compiler_params=pltpu.CompilerParams(
            dimension_semantics=("parallel",)),
    )(ids, reach, ep_oh)

    node_mask = node_mask[:B, :N]
    edge_mask = edge_mask[:B, :E]
    node_pos = node_pos[:B]
    # edge_value * tmp4 — done here so the kernel writes only one (B, E) slab.
    edge_attr = edge_mask * edge_value.reshape(1, E).astype(jnp.float32)
    return node_mask, edge_mask, edge_attr, node_pos


# ---------------------------------------------------------------------------
# Pure python/numpy reference mirroring torch k_hop_subgraph semantics.
# ---------------------------------------------------------------------------
def _reference(node_list, edge_index, edge_value, N, num_hop):
    src = np.asarray(edge_index[0])
    tgt = np.asarray(edge_index[1])
    ev = np.asarray(edge_value)
    node_masks, edge_masks, edge_attrs, positions = [], [], [], []
    for c in np.asarray(node_list):
        subset = {int(c)}
        frontier = {int(c)}
        for _ in range(num_hop):
            new = {int(s) for s, t in zip(src, tgt) if int(t) in frontier}
            frontier = new
            subset |= new
        nm = np.zeros(N, np.float32)
        nm[list(subset)] = 1.0
        em = (nm[src] * nm[tgt]).astype(np.float32)
        node_masks.append(nm)
        edge_masks.append(em)
        edge_attrs.append(em * ev)
        positions.append(int(np.sum(np.array(sorted(subset)) < int(c))))
    return (np.stack(node_masks), np.stack(edge_masks),
            np.stack(edge_attrs), np.array(positions, np.int32).reshape(-1, 1))


if __name__ == "__main__":
    N = 96          # total_num_nodes (padded to 128 inside)
    E = 160         # number of edges (padded to 256 inside)
    B = 256         # batch of center nodes -> grid of 2 tiles of tb=128
    NUM_HOP = 2
    K = 8           # edge truncation handled by ragged glue (see TODO above)

    key = jax.random.PRNGKey(0)
    k1, k2, k3, k4 = jax.random.split(key, 4)
    src = jax.random.randint(k1, (E,), 0, N, dtype=jnp.int32)
    tgt = jax.random.randint(k2, (E,), 0, N, dtype=jnp.int32)
    edge_index = jnp.stack([src, tgt], axis=0)                  # (2, E)
    edge_value = jax.random.uniform(k3, (E,), jnp.float32) + 0.1
    node_list = jax.random.randint(k4, (B,), 0, N, dtype=jnp.int32)

    # per-graph tables (cache these across batches in real use)
    reach, ep_oh = build_graph_tables(edge_index, total_num_nodes=N,
                                      num_hop=NUM_HOP)

    node_mask, edge_mask, edge_attr, node_pos = jax.block_until_ready(
        subgraph_extractor_pallas(node_list, edge_value, reach, ep_oh,
                                  total_num_nodes=N, num_edges=E, tb=128))

    ref_nm, ref_em, ref_ea, ref_pos = _reference(node_list, edge_index,
                                                 edge_value, N, NUM_HOP)
    np.testing.assert_allclose(np.asarray(node_mask), ref_nm, atol=1e-6)
    np.testing.assert_allclose(np.asarray(edge_mask), ref_em, atol=1e-6)
    np.testing.assert_allclose(np.asarray(edge_attr), ref_ea, rtol=1e-5, atol=1e-6)
    np.testing.assert_array_equal(np.asarray(node_pos), ref_pos)

    print("KERNEL_OK")
</pallas_src>

<mosaic_0001>
module attributes {stable_mosaic.version = 11 : i64} {
  func.func @_reach_kernel(%arg0: i32, %arg1: memref<128x128xbf16, #tpu.memory_space<vmem>>, %arg2: memref<128x128xbf16, #tpu.memory_space<vmem>>) attributes {dimension_semantics = [#tpu.dimension_semantics<arbitrary>], iteration_bounds = array<i64: 1>, scalar_prefetch = 0 : i64, scratch_operands = 0 : i64, tpu.core_type = #tpu.core_type<tc>, window_params = [{pipeline_mode = #tpu.pipeline_mode<synchronous>, transform_indices = @transform_0, window_bounds = array<i64: 128, 128>}, {pipeline_mode = #tpu.pipeline_mode<synchronous>, transform_indices = @transform_1, window_bounds = array<i64: 128, 128>}]} {
    %0 = tpu.iota {dimensions = array<i32: 0>} : vector<128x128xi32>
    %1 = tpu.iota {dimensions = array<i32: 1>} : vector<128x128xi32>
    %2 = arith.cmpi eq, %0, %1 : vector<128x128xi32>
    %3 = arith.extui %2 : vector<128x128xi1> to vector<128x128xi32>
    %4 = arith.sitofp %3 : vector<128x128xi32> to vector<128x128xf32>
    %5 = arith.truncf %4 : vector<128x128xf32> to vector<128x128xbf16>
    %c0 = arith.constant 0 : index
    %c0_0 = arith.constant 0 : index
    %6 = vector.load %arg1[%c0, %c0_0] : memref<128x128xbf16, #tpu.memory_space<vmem>>, vector<128x128xbf16>
    %cst = arith.constant dense<0.000000e+00> : vector<128x128xf32>
    %7 = tpu.matmul %5, %6, %cst {dimension_numbers = #tpu.dot_dimension_numbers<[1], [0], [0], [1], [0, 0, 1, 1], [], []>} : vector<128x128xbf16>, vector<128x128xbf16>, vector<128x128xf32> -> vector<128x128xf32>
    %8 = arith.addf %4, %7 : vector<128x128xf32>
    %cst_1 = arith.constant 1.000000e+00 : f32
    %9 = vector.broadcast %cst_1 : f32 to vector<128x128xf32>
    %10 = arith.minimumf %8, %9 : vector<128x128xf32>
    %11 = arith.truncf %10 : vector<128x128xf32> to vector<128x128xbf16>
    %c0_2 = arith.constant 0 : index
    %c0_3 = arith.constant 0 : index
    %12 = vector.load %arg1[%c0_2, %c0_3] : memref<128x128xbf16, #tpu.memory_space<vmem>>, vector<128x128xbf16>
    %cst_4 = arith.constant dense<0.000000e+00> : vector<128x128xf32>
    %13 = tpu.matmul %11, %12, %cst_4 {dimension_numbers = #tpu.dot_dimension_numbers<[1], [0], [0], [1], [0, 0, 1, 1], [], []>} : vector<128x128xbf16>, vector<128x128xbf16>, vector<128x128xf32> -> vector<128x128xf32>
    %14 = arith.addf %10, %13 : vector<128x128xf32>
    %cst_5 = arith.constant 1.000000e+00 : f32
    %15 = vector.broadcast %cst_5 : f32 to vector<128x128xf32>
    %16 = arith.minimumf %14, %15 : vector<128x128xf32>
    %17 = arith.truncf %16 : vector<128x128xf32> to vector<128x128xbf16>
    %c0_6 = arith.constant 0 : index
    %c0_7 = arith.constant 0 : index
    %18 = vector.load %arg2[%c0_6, %c0_7] : memref<128x128xbf16, #tpu.memory_space<vmem>>, vector<128x128xbf16>
    tpu.vector_store %arg2[%c0_6, %c0_7], %17 {strides = array<i32>} : memref<128x128xbf16, #tpu.memory_space<vmem>>, vector<128x128xbf16>,
    return
  }
  func.func @transform_0(%arg0: i32) -> (i32, i32) {
    %c0_i32 = arith.constant 0 : i32
    %c0_i32_0 = arith.constant 0 : i32
    %c0_i32_1 = arith.constant 0 : i32
    return %c0_i32, %c0_i32_0 : i32, i32
  }
  func.func @transform_1(%arg0: i32) -> (i32, i32) {
    %c0_i32 = arith.constant 0 : i32
    %c0_i32_0 = arith.constant 0 : i32
    %c0_i32_1 = arith.constant 0 : i32
    return %c0_i32, %c0_i32_0 : i32, i32
  }
}

</mosaic_0001>

<llo_original>
// kernel: tpu_custom_call.1
$region0: #{tpu_custom_call.1}
  #allocation0 [shape = 'u32[]', space=smem, size = 0x4, offset = 0x4, fixed_abs, tag = 'smem constant byte address 0x4 - core index']
  #allocation1 [shape = 'u32[144,128]{1,0:T(1,128)}', space=vmem, size = 0x12000, scoped, tag = 'internal scratch']
  %s0 = inlined_call_operand.hbm [shape: bf16[128,128], index: 0, kind: input, shape index: {}]
  %s1 = inlined_call_operand.hbm [shape: bf16[128,128], index: 1, kind: output, shape index: {}]
  %s2 = sld [smem:[#allocation0]]
  $region18: #{tpu_custom_call.1} parent=0
    _
  %s4 = ssub.s32 1, %s2
  %s5 = scalar_select 0, %s4, %s2
  $region1: #{tpu_custom_call.1} parent=0
    #allocation2 [shape = 'u8[32768]{0}', space=vmem, size = 0x8000, scoped, tag = 'input window, operand 0, single buffered']
    #allocation3 [shape = 's32[1]{0}', space=sflag, size = 0x4, scoped, tag = 'scoped memory for tpu_custom_call.1']
    #allocation4 [shape = 's32[1]{0}', space=sflag, size = 0x4, scoped, tag = 'scoped memory for tpu_custom_call.1']
    #allocation5 [shape = 'u8[32768]{0}', space=vmem, size = 0x8000, scoped, tag = 'output window, operand 0, single buffered']
    %6 = vsyncpa [#allocation3], 0
    %7 = vsyncpa [#allocation4], 0
    // Predicated region
    $region2: #{tpu_custom_call.1} parent=1 // pred_check
      _
    $region3: #{tpu_custom_call.1} parent=1 // pred_check_branch
      %9 = sbr.rel (0) target = $region5
    $region4: #{tpu_custom_call.1} parent=1 // pred_region
      %s11 = ssub.s32 1024, 1024
      %12 = vsyncadd [#allocation3], %s11
      %s13 = sshll.u32 [#allocation2], 4
      %s14 = int_to_ptr.vmem [resolvable:$true] %s13
      %19 = dma.hbm_to_vmem [thread:$0]  %s0, 1024, %s14, [#allocation3], 64, 64, 4
    $region5: #{tpu_custom_call.1} parent=1 // pred_fallthru
      _
    // Predicated region
    $region6: #{tpu_custom_call.1} parent=1 // pred_check
      _
    $region7: #{tpu_custom_call.1} parent=1 // pred_check_branch
      %21 = sbr.rel (0) target = $region9
    $region8: #{tpu_custom_call.1} parent=1 // pred_region
      %22 = dma.done [#allocation3], 1024
    $region9: #{tpu_custom_call.1} parent=1 // pred_fallthru
      _
    %v24 = vlaneseq
    %v25 = vshrl.u32 %v24, 7
    %v26 = vadd.s32 %v25, 8
    %v27 = vadd.s32 %v25, 16
    %v28 = vadd.s32 %v25, 24
    %v29 = vadd.s32 %v25, 32
    %v30 = vadd.s32 %v25, 40
    %v31 = vadd.s32 %v25, 48
    %v32 = vadd.s32 %v25, 56
    %v33 = vadd.s32 %v25, 64
    %v34 = vadd.s32 %v25, 72
    %v35 = vadd.s32 %v25, 80
    %v36 = vadd.s32 %v25, 88
    %v37 = vadd.s32 %v25, 96
    %v38 = vadd.s32 %v25, 104
    %v39 = vadd.s32 %v25, 112
    %v40 = vadd.s32 %v25, 120
    %v41 = vlaneseq
    %v42 = vand.u32 %v41, 127
    %vm43 = vcmp.eq.s32.totalorder %v25, %v42
    %vm44 = vcmp.eq.s32.totalorder %v26, %v42
    %vm45 = vcmp.eq.s32.totalorder %v27, %v42
    %vm46 = vcmp.eq.s32.totalorder %v28, %v42
    %vm47 = vcmp.eq.s32.totalorder %v29, %v42
    %vm48 = vcmp.eq.s32.totalorder %v30, %v42
    %vm49 = vcmp.eq.s32.totalorder %v31, %v42
    %vm50 = vcmp.eq.s32.totalorder %v32, %v42
    %vm51 = vcmp.eq.s32.totalorder %v33, %v42
    %vm52 = vcmp.eq.s32.totalorder %v34, %v42
    %vm53 = vcmp.eq.s32.totalorder %v35, %v42
    %vm54 = vcmp.eq.s32.totalorder %v36, %v42
    %vm55 = vcmp.eq.s32.totalorder %v37, %v42
    %vm56 = vcmp.eq.s32.totalorder %v38, %v42
    %vm57 = vcmp.eq.s32.totalorder %v39, %v42
    %vm58 = vcmp.eq.s32.totalorder %v40, %v42
    %v59 = vsel %vm43, 1, 0
    %v60 = vsel %vm44, 1, 0
    %v61 = vsel %vm45, 1, 0
    %v62 = vsel %vm46, 1, 0
    %v63 = vsel %vm47, 1, 0
    %v64 = vsel %vm48, 1, 0
    %v65 = vsel %vm49, 1, 0
    %v66 = vsel %vm50, 1, 0
    %v67 = vsel %vm51, 1, 0
    %v68 = vsel %vm52, 1, 0
    %v69 = vsel %vm53, 1, 0
    %v70 = vsel %vm54, 1, 0
    %v71 = vsel %vm55, 1, 0
    %v72 = vsel %vm56, 1, 0
    %v73 = vsel %vm57, 1, 0
    %v74 = vsel %vm58, 1, 0
    %v75 = vcvt.s32.f32 %v59
    %v76 = vcvt.s32.f32 %v60
    %v77 = vcvt.s32.f32 %v61
    %v78 = vcvt.s32.f32 %v62
    %v79 = vcvt.s32.f32 %v63
    %v80 = vcvt.s32.f32 %v64
    %v81 = vcvt.s32.f32 %v65
    %v82 = vcvt.s32.f32 %v66
    %v83 = vcvt.s32.f32 %v67
    %v84 = vcvt.s32.f32 %v68
    %v85 = vcvt.s32.f32 %v69
    %v86 = vcvt.s32.f32 %v70
    %v87 = vcvt.s32.f32 %v71
    %v88 = vcvt.s32.f32 %v72
    %v89 = vcvt.s32.f32 %v73
    %v90 = vcvt.s32.f32 %v74
    %v91 = vpack.c.bf16 %v76, %v75
    %v92 = vpack.c.bf16 %v78, %v77
    %v93 = vpack.c.bf16 %v80, %v79
    %v94 = vpack.c.bf16 %v82, %v81
    %v95 = vpack.c.bf16 %v84, %v83
    %v96 = vpack.c.bf16 %v86, %v85
    %v97 = vpack.c.bf16 %v88, %v87
    %v98 = vpack.c.bf16 %v90, %v89
    %v99 = vld [vmem:[#allocation2] sm:$0xf]
    %v100 = vld [vmem:[#allocation2 + $0x4] sm:$0xf]
    %v101 = vld [vmem:[#allocation2 + $0x8] sm:$0xf]
    %v102 = vld [vmem:[#allocation2 + $0xc] sm:$0xf]
    %v103 = vld [vmem:[#allocation2 + $0x10] sm:$0xf]
    %v104 = vld [vmem:[#allocation2 + $0x14] sm:$0xf]
    %v105 = vld [vmem:[#allocation2 + $0x18] sm:$0xf]
    %v106 = vld [vmem:[#allocation2 + $0x1c] sm:$0xf]
    %v107 = vld [vmem:[#allocation2 + $0x20] sm:$0xf]
    %v108 = vld [vmem:[#allocation2 + $0x24] sm:$0xf]
    %v109 = vld [vmem:[#allocation2 + $0x28] sm:$0xf]
    %v110 = vld [vmem:[#allocation2 + $0x2c] sm:$0xf]
    %v111 = vld [vmem:[#allocation2 + $0x30] sm:$0xf]
    %v112 = vld [vmem:[#allocation2 + $0x34] sm:$0xf]
    %v113 = vld [vmem:[#allocation2 + $0x38] sm:$0xf]
    %v114 = vld [vmem:[#allocation2 + $0x3c] sm:$0xf]
    %v131 = vunpack.c.l.b16 %v99
    %v132 = vunpack.c.l.b16 %v100
    %v133 = vunpack.c.l.b16 %v101
    %v134 = vunpack.c.l.b16 %v102
    %v135 = vunpack.c.l.b16 %v103
    %v136 = vunpack.c.l.b16 %v104
    %v137 = vunpack.c.l.b16 %v105
    %v138 = vunpack.c.l.b16 %v106
    %v139 = vunpack.c.l.b16 %v107
    %v140 = vunpack.c.l.b16 %v108
    %v141 = vunpack.c.l.b16 %v109
    %v142 = vunpack.c.l.b16 %v110
    %v143 = vunpack.c.l.b16 %v111
    %v144 = vunpack.c.l.b16 %v112
    %v145 = vunpack.c.l.b16 %v113
    %v146 = vunpack.c.l.b16 %v114
    %v147 = vpack.c.b16 %v132, %v131
    %v148 = vpack.c.b16 %v134, %v133
    %v149 = vpack.c.b16 %v136, %v135
    %v150 = vpack.c.b16 %v138, %v137
    %v151 = vpack.c.b16 %v140, %v139
    %v152 = vpack.c.b16 %v142, %v141
    %v153 = vpack.c.b16 %v144, %v143
    %v154 = vpack.c.b16 %v146, %v145
    %163 = vmatprep.subr.bf16.mxu0 0
    %164 = vmatpush1.bf16.msra.mxu0 %v154
    %165 = vmatprep.subr.bf16.mxu0 0
    %166 = vmatpush1.bf16.msra.mxu0 %v153
    %167 = vmatprep.subr.bf16.mxu0 0
    %168 = vmatpush1.bf16.msra.mxu0 %v152
    %169 = vmatprep.subr.bf16.mxu0 0
    %170 = vmatpush1.bf16.msra.mxu0 %v151
    %171 = vmatprep.subr.bf16.mxu0 0
    %172 = vmatpush1.bf16.msra.mxu0 %v150
    %173 = vmatprep.subr.bf16.mxu0 0
    %174 = vmatpush1.bf16.msra.mxu0 %v149
    %175 = vmatprep.subr.bf16.mxu0 0
    %176 = vmatpush1.bf16.msra.mxu0 %v148
    %177 = vmatprep.subr.bf16.mxu0 0
    %178 = vmatpush1.bf16.msra.mxu0 %v147
    %179 = vmatprep.subr.bf16.mxu0 0
    %180 = vmatpush2.bf16.msra.mxu0 0
    %181 = vmatprep.subr.bf16.mxu0 0
    %182 = vmatpush2.bf16.msra.mxu0 0
    %183 = vmatprep.subr.bf16.mxu0 0
    %184 = vmatpush2.bf16.msra.mxu0 0
    %185 = vmatprep.subr.bf16.mxu0 0
    %186 = vmatpush2.bf16.msra.mxu0 0
    %187 = vmatprep.subr.bf16.mxu0 0
    %188 = vmatpush2.bf16.msra.mxu0 0
    %189 = vmatprep.subr.bf16.mxu0 0
    %190 = vmatpush2.bf16.msra.mxu0 0
    %191 = vmatprep.subr.bf16.mxu0 0
    %192 = vmatpush2.bf16.msra.mxu0 0
    %193 = vmatprep.subr.bf16.mxu0 0
    %194 = vmatpush2.bf16.msra.mxu0 0
    %195 = vmatprep.mubr.bf16.mxu0 0
    %196 = vmatmul.mubr.bf16.gmra.mxu0 %v91
    %v197 = vpop.f32.mrf.mxu0
    %v198 = vadd.f32 0.0, %v197
    %v199 = vpop.f32.mrf.mxu0
    %v200 = vpop.f32.mrf.mxu0
    %v201 = vadd.f32 0.0, %v200
    %v202 = vpop.f32.mrf.mxu0
    %203 = vmatprep.mubr.bf16.mxu0 0
    %204 = vmatmul.mubr.bf16.gmra.mxu0 %v92
    %v205 = vpop.f32.mrf.mxu0
    %v206 = vadd.f32 0.0, %v205
    %v207 = vpop.f32.mrf.mxu0
    %v208 = vpop.f32.mrf.mxu0
    %v209 = vadd.f32 0.0, %v208
    %v210 = vpop.f32.mrf.mxu0
    %211 = vmatprep.mubr.bf16.mxu0 0
    %212 = vmatmul.mubr.bf16.gmra.mxu0 %v93
    %v213 = vpop.f32.mrf.mxu0
    %v214 = vadd.f32 0.0, %v213
    %v215 = vpop.f32.mrf.mxu0
    %v216 = vpop.f32.mrf.mxu0
    %v217 = vadd.f32 0.0, %v216
    %v218 = vpop.f32.mrf.mxu0
    %219 = vmatprep.mubr.bf16.mxu0 0
    %220 = vmatmul.mubr.bf16.gmra.mxu0 %v94
    %v221 = vpop.f32.mrf.mxu0
    %v222 = vadd.f32 0.0, %v221
    %v223 = vpop.f32.mrf.mxu0
    %v224 = vpop.f32.mrf.mxu0
    %v225 = vadd.f32 0.0, %v224
    %v226 = vpop.f32.mrf.mxu0
    %227 = vmatprep.mubr.bf16.mxu0 0
    %228 = vmatmul.mubr.bf16.gmra.mxu0 %v95
    %v229 = vpop.f32.mrf.mxu0
    %v230 = vadd.f32 0.0, %v229
    %v231 = vpop.f32.mrf.mxu0
    %v232 = vpop.f32.mrf.mxu0
    %v233 = vadd.f32 0.0, %v232
    %v234 = vpop.f32.mrf.mxu0
    %235 = vmatprep.mubr.bf16.mxu0 0
    %236 = vmatmul.mubr.bf16.gmra.mxu0 %v96
    %v237 = vpop.f32.mrf.mxu0
    %v238 = vadd.f32 0.0, %v237
    %v239 = vpop.f32.mrf.mxu0
    %v240 = vpop.f32.mrf.mxu0
    %v241 = vadd.f32 0.0, %v240
    %v242 = vpop.f32.mrf.mxu0
    %243 = vmatprep.mubr.bf16.mxu0 0
    %244 = vmatmul.mubr.bf16.gmra.mxu0 %v97
    %v245 = vpop.f32.mrf.mxu0
    %v246 = vadd.f32 0.0, %v245
    %v247 = vpop.f32.mrf.mxu0
    %v248 = vpop.f32.mrf.mxu0
    %v249 = vadd.f32 0.0, %v248
    %v250 = vpop.f32.mrf.mxu0
    %251 = vmatprep.mubr.bf16.mxu0 0
    %252 = vmatmul.mubr.bf16.gmra.mxu0 %v98
    %v253 = vpop.f32.mrf.mxu0
    %v254 = vadd.f32 0.0, %v253
    %v255 = vpop.f32.mrf.mxu0
    %v256 = vpop.f32.mrf.mxu0
    %v257 = vadd.f32 0.0, %v256
    %v258 = vpop.f32.mrf.mxu0
    %259 = vdwg.mxu0
    %v260 = vadd.f32 %v75, %v198
    %v261 = vadd.f32 %v76, %v201
    %v262 = vadd.f32 %v77, %v206
    %v263 = vadd.f32 %v78, %v209
    %v264 = vadd.f32 %v79, %v214
    %v265 = vadd.f32 %v80, %v217
    %v266 = vadd.f32 %v81, %v222
    %v267 = vadd.f32 %v82, %v225
    %v268 = vadd.f32 %v83, %v230
    %v269 = vadd.f32 %v84, %v233
    %v270 = vadd.f32 %v85, %v238
    %v271 = vadd.f32 %v86, %v241
    %v272 = vadd.f32 %v87, %v246
    %v273 = vadd.f32 %v88, %v249
    %v274 = vadd.f32 %v89, %v254
    %v275 = vadd.f32 %v90, %v257
    %v276 = vmin.f32 %v260, 1.0
    %v277 = vmin.f32 %v261, 1.0
    %v278 = vmin.f32 %v262, 1.0
    %v279 = vmin.f32 %v263, 1.0
    %v280 = vmin.f32 %v264, 1.0
    %v281 = vmin.f32 %v265, 1.0
    %v282 = vmin.f32 %v266, 1.0
    %v283 = vmin.f32 %v267, 1.0
    %v284 = vmin.f32 %v268, 1.0
    %v285 = vmin.f32 %v269, 1.0
    %v286 = vmin.f32 %v270, 1.0
    %v287 = vmin.f32 %v271, 1.0
    %v288 = vmin.f32 %v272, 1.0
    %v289 = vmin.f32 %v273, 1.0
    %v290 = vmin.f32 %v274, 1.0
    %v291 = vmin.f32 %v275, 1.0
    %v292 = vpack.c.bf16 %v277, %v276
    %v293 = vpack.c.bf16 %v279, %v278
    %v294 = vpack.c.bf16 %v281, %v280
    %v295 = vpack.c.bf16 %v283, %v282
    %v296 = vpack.c.bf16 %v285, %v284
    %v297 = vpack.c.bf16 %v287, %v286
    %v298 = vpack.c.bf16 %v289, %v288
    %v299 = vpack.c.bf16 %v291, %v290
    %300 = vmatprep.subr.bf16.mxu0 0
    %301 = vmatpush1.bf16.msra.mxu0 %v154
    %302 = vmatprep.subr.bf16.mxu0 0
    %303 = vmatpush1.bf16.msra.mxu0 %v153
    %304 = vmatprep.subr.bf16.mxu0 0
    %305 = vmatpush1.bf16.msra.mxu0 %v152
    %306 = vmatprep.subr.bf16.mxu0 0
    %307 = vmatpush1.bf16.msra.mxu0 %v151
    %308 = vmatprep.subr.bf16.mxu0 0
    %309 = vmatpush1.bf16.msra.mxu0 %v150
    %310 = vmatprep.subr.bf16.mxu0 0
    %311 = vmatpush1.bf16.msra.mxu0 %v149
    %312 = vmatprep.subr.bf16.mxu0 0
    %313 = vmatpush1.bf16.msra.mxu0 %v148
    %314 = vmatprep.subr.bf16.mxu0 0
    %315 = vmatpush1.bf16.msra.mxu0 %v147
    %316 = vmatprep.subr.bf16.mxu0 0
    %317 = vmatpush2.bf16.msra.mxu0 0
    %318 = vmatprep.subr.bf16.mxu0 0
    %319 = vmatpush2.bf16.msra.mxu0 0
    %320 = vmatprep.subr.bf16.mxu0 0
    %321 = vmatpush2.bf16.msra.mxu0 0
    %322 = vmatprep.subr.bf16.mxu0 0
    %323 = vmatpush2.bf16.msra.mxu0 0
    %324 = vmatprep.subr.bf16.mxu0 0
    %325 = vmatpush2.bf16.msra.mxu0 0
    %326 = vmatprep.subr.bf16.mxu0 0
    %327 = vmatpush2.bf16.msra.mxu0 0
    %328 = vmatprep.subr.bf16.mxu0 0
    %329 = vmatpush2.bf16.msra.mxu0 0
    %330 = vmatprep.subr.bf16.mxu0 0
    %331 = vmatpush2.bf16.msra.mxu0 0
    %332 = vmatprep.mubr.bf16.mxu0 0
    %333 = vmatmul.mubr.bf16.gmra.mxu0 %v292
    %v334 = vpop.f32.mrf.mxu0
    %v335 = vadd.f32 0.0, %v334
    %v336 = vpop.f32.mrf.mxu0
    %v337 = vpop.f32.mrf.mxu0
    %v338 = vadd.f32 0.0, %v337
    %v339 = vpop.f32.mrf.mxu0
    %340 = vmatprep.mubr.bf16.mxu0 0
    %341 = vmatmul.mubr.bf16.gmra.mxu0 %v293
    %v342 = vpop.f32.mrf.mxu0
    %v343 = vadd.f32 0.0, %v342
    %v344 = vpop.f32.mrf.mxu0
    %v345 = vpop.f32.mrf.mxu0
    %v346 = vadd.f32 0.0, %v345
    %v347 = vpop.f32.mrf.mxu0
    %348 = vmatprep.mubr.bf16.mxu0 0
    %349 = vmatmul.mubr.bf16.gmra.mxu0 %v294
    %v350 = vpop.f32.mrf.mxu0
    %v351 = vadd.f32 0.0, %v350
    %v352 = vpop.f32.mrf.mxu0
    %v353 = vpop.f32.mrf.mxu0
    %v354 = vadd.f32 0.0, %v353
    %v355 = vpop.f32.mrf.mxu0
    %356 = vmatprep.mubr.bf16.mxu0 0
    %357 = vmatmul.mubr.bf16.gmra.mxu0 %v295
    %v358 = vpop.f32.mrf.mxu0
    %v359 = vadd.f32 0.0, %v358
    %v360 = vpop.f32.mrf.mxu0
    %v361 = vpop.f32.mrf.mxu0
    %v362 = vadd.f32 0.0, %v361
    %v363 = vpop.f32.mrf.mxu0
    %364 = vmatprep.mubr.bf16.mxu0 0
    %365 = vmatmul.mubr.bf16.gmra.mxu0 %v296
    %v366 = vpop.f32.mrf.mxu0
    %v367 = vadd.f32 0.0, %v366
    %v368 = vpop.f32.mrf.mxu0
    %v369 = vpop.f32.mrf.mxu0
    %v370 = vadd.f32 0.0, %v369
    %v371 = vpop.f32.mrf.mxu0
    %372 = vmatprep.mubr.bf16.mxu0 0
    %373 = vmatmul.mubr.bf16.gmra.mxu0 %v297
    %v374 = vpop.f32.mrf.mxu0
    %v375 = vadd.f32 0.0, %v374
    %v376 = vpop.f32.mrf.mxu0
    %v377 = vpop.f32.mrf.mxu0
    %v378 = vadd.f32 0.0, %v377
    %v379 = vpop.f32.mrf.mxu0
    %380 = vmatprep.mubr.bf16.mxu0 0
    %381 = vmatmul.mubr.bf16.gmra.mxu0 %v298
    %v382 = vpop.f32.mrf.mxu0
    %v383 = vadd.f32 0.0, %v382
    %v384 = vpop.f32.mrf.mxu0
    %v385 = vpop.f32.mrf.mxu0
    %v386 = vadd.f32 0.0, %v385
    %v387 = vpop.f32.mrf.mxu0
    %388 = vmatprep.mubr.bf16.mxu0 0
    %389 = vmatmul.mubr.bf16.gmra.mxu0 %v299
    %v390 = vpop.f32.mrf.mxu0
    %v391 = vadd.f32 0.0, %v390
    %v392 = vpop.f32.mrf.mxu0
    %v393 = vpop.f32.mrf.mxu0
    %v394 = vadd.f32 0.0, %v393
    %v395 = vpop.f32.mrf.mxu0
    %396 = vdwg.mxu0
    %v397 = vadd.f32 %v276, %v335
    %v398 = vadd.f32 %v277, %v338
    %v399 = vadd.f32 %v278, %v343
    %v400 = vadd.f32 %v279, %v346
    %v401 = vadd.f32 %v280, %v351
    %v402 = vadd.f32 %v281, %v354
    %v403 = vadd.f32 %v282, %v359
    %v404 = vadd.f32 %v283, %v362
    %v405 = vadd.f32 %v284, %v367
    %v406 = vadd.f32 %v285, %v370
    %v407 = vadd.f32 %v286, %v375
    %v408 = vadd.f32 %v287, %v378
    %v409 = vadd.f32 %v288, %v383
    %v410 = vadd.f32 %v289, %v386
    %v411 = vadd.f32 %v290, %v391
    %v412 = vadd.f32 %v291, %v394
    %v413 = vmin.f32 %v397, 1.0
    %v414 = vmin.f32 %v398, 1.0
    %v415 = vmin.f32 %v399, 1.0
    %v416 = vmin.f32 %v400, 1.0
    %v417 = vmin.f32 %v401, 1.0
    %v418 = vmin.f32 %v402, 1.0
    %v419 = vmin.f32 %v403, 1.0
    %v420 = vmin.f32 %v404, 1.0
    %v421 = vmin.f32 %v405, 1.0
    %v422 = vmin.f32 %v406, 1.0
    %v423 = vmin.f32 %v407, 1.0
    %v424 = vmin.f32 %v408, 1.0
    %v425 = vmin.f32 %v409, 1.0
    %v426 = vmin.f32 %v410, 1.0
    %v427 = vmin.f32 %v411, 1.0
    %v428 = vmin.f32 %v412, 1.0
    %v429 = vpack.c.bf16 %v414, %v413
    %v430 = vpack.c.bf16 %v416, %v415
    %v431 = vpack.c.bf16 %v418, %v417
    %v432 = vpack.c.bf16 %v420, %v419
    %v433 = vpack.c.bf16 %v422, %v421
    %v434 = vpack.c.bf16 %v424, %v423
    %v435 = vpack.c.bf16 %v426, %v425
    %v436 = vpack.c.bf16 %v428, %v427
    %v445 = vunpack.c.l.b16 %v429
    %v446 = vunpack.c.h.b16 %v429
    %v447 = vunpack.c.l.b16 %v430
    %v448 = vunpack.c.h.b16 %v430
    %v449 = vunpack.c.l.b16 %v431
    %v450 = vunpack.c.h.b16 %v431
    %v451 = vunpack.c.l.b16 %v432
    %v452 = vunpack.c.h.b16 %v432
    %v453 = vunpack.c.l.b16 %v433
    %v454 = vunpack.c.h.b16 %v433
    %v455 = vunpack.c.l.b16 %v434
    %v456 = vunpack.c.h.b16 %v434
    %v457 = vunpack.c.l.b16 %v435
    %v458 = vunpack.c.h.b16 %v435
    %v459 = vunpack.c.l.b16 %v436
    %v460 = vunpack.c.h.b16 %v436
    %v461 = vpack.c.b16 %v445, %v445
    %v462 = vpack.c.b16 %v446, %v446
    %v463 = vpack.c.b16 %v447, %v447
    %v464 = vpack.c.b16 %v448, %v448
    %v465 = vpack.c.b16 %v449, %v449
    %v466 = vpack.c.b16 %v450, %v450
    %v467 = vpack.c.b16 %v451, %v451
    %v468 = vpack.c.b16 %v452, %v452
    %v469 = vpack.c.b16 %v453, %v453
    %v470 = vpack.c.b16 %v454, %v454
    %v471 = vpack.c.b16 %v455, %v455
    %v472 = vpack.c.b16 %v456, %v456
    %v473 = vpack.c.b16 %v457, %v457
    %v474 = vpack.c.b16 %v458, %v458
    %v475 = vpack.c.b16 %v459, %v459
    %v476 = vpack.c.b16 %v460, %v460
    %493 = vst [vmem:[#allocation5] sm:$0xf] %v461
    %494 = vst [vmem:[#allocation5 + $0x4] sm:$0xf] %v462
    %495 = vst [vmem:[#allocation5 + $0x8] sm:$0xf] %v463
    %496 = vst [vmem:[#allocation5 + $0xc] sm:$0xf] %v464
    %497 = vst [vmem:[#allocation5 + $0x10] sm:$0xf] %v465
    %498 = vst [vmem:[#allocation5 + $0x14] sm:$0xf] %v466
    %499 = vst [vmem:[#allocation5 + $0x18] sm:$0xf] %v467
    %500 = vst [vmem:[#allocation5 + $0x1c] sm:$0xf] %v468
    %501 = vst [vmem:[#allocation5 + $0x20] sm:$0xf] %v469
    %502 = vst [vmem:[#allocation5 + $0x24] sm:$0xf] %v470
    %503 = vst [vmem:[#allocation5 + $0x28] sm:$0xf] %v471
    %504 = vst [vmem:[#allocation5 + $0x2c] sm:$0xf] %v472
    %505 = vst [vmem:[#allocation5 + $0x30] sm:$0xf] %v473
    %506 = vst [vmem:[#allocation5 + $0x34] sm:$0xf] %v474
    %507 = vst [vmem:[#allocation5 + $0x38] sm:$0xf] %v475
    %508 = vst [vmem:[#allocation5 + $0x3c] sm:$0xf] %v476
    // Predicated region
    $region10: #{tpu_custom_call.1} parent=1 // pred_check
      _
    $region11: #{tpu_custom_call.1} parent=1 // pred_check_branch
      %510 = sbr.rel (0) target = $region13
    $region12: #{tpu_custom_call.1} parent=1 // pred_region
      %s512 = ssub.s32 1024, 1024
      %513 = vsyncadd [#allocation4], %s512
      %s514 = sshll.u32 [#allocation5], 4
      %s515 = int_to_ptr.vmem [resolvable:$true] %s514
      %520 = dma.vmem_to_hbm [thread:$0]  %s515, 1024, %s1, [#allocation4], 64, 64, 4
    $region13: #{tpu_custom_call.1} parent=1 // pred_fallthru
      _
    // Predicated region
    $region14: #{tpu_custom_call.1} parent=1 // pred_check
      _
    $region15: #{tpu_custom_call.1} parent=1 // pred_check_branch
      %522 = sbr.rel (0) target = $region17
    $region16: #{tpu_custom_call.1} parent=1 // pred_region
      %523 = dma.done [#allocation4], 1024
    $region17: #{tpu_custom_call.1} parent=1 // pred_fallthru
      _
    %524 = vsyncpa [#allocation3], 1
    %525 = vsyncpa [#allocation4], 1

</llo_original>
